<compile_context>
chip_gen: v5e
topology: v5e:2x2
jax: 0.10.0
libtpu: 0.0.40
codegen_flags: <defaults>
</compile_context>

<pallas_src>
import numpy as np
import jax
import jax.numpy as jnp
from jax import lax
from jax.experimental import pallas as pl
from jax.experimental.pallas import tpu as pltpu


def _interp_matrix(out_size, in_size):
    """Bilinear (align_corners=True) 1-D interpolation matrix (out_size, in_size)."""
    M = np.zeros((out_size, in_size), dtype=np.float32)
    if in_size == 1:
        M[:, 0] = 1.0
        return M
    for i in range(out_size):
        s = i * (in_size - 1) / (out_size - 1) if out_size > 1 else 0.0
        i0 = min(int(np.floor(s)), in_size - 1)
        i1 = min(i0 + 1, in_size - 1)
        f = s - i0
        M[i, i0] += 1.0 - f
        M[i, i1] += f
    return M


def point_matcher_kernel(xh_ref, xl_ref, lh_ref, ll_ref, rh_ref, rl_ref,
                         bias_ref, out_ref):
    # xh_ref : (N*C*H,  W)    x_high in its natural NCHW order (free reshape)
    # xl_ref : (N*C*Hl, Wl)   x_low  in its natural NCHW order (free reshape)
    # lh_ref : (3, N*H, N*C*H)   left ops (per dx), high path
    # ll_ref : (3, N*H, N*C*Hl)  left ops (per dx), low path (row interp folded)
    # rh_ref : (3, W,  Wout)     right ops (per dx), high path (col shift, lane-padded)
    # rl_ref : (3, Wl, Wout)     right ops (per dx), low path (col interp, lane-padded)
    # bias_ref: (1, 1) scalar in SMEM
    # out_ref: (N*H, Wout)       Wout is a multiple of 128 -> unmasked stores
    xh = xh_ref[...]
    xl = xl_ref[...]
    bias = bias_ref[0, 0]

    acc = None
    for dx in range(3):                                   # unrolled at trace time
        th = jnp.dot(lh_ref[dx], xh, preferred_element_type=jnp.float32)   # (N*H, W)
        tl = jnp.dot(ll_ref[dx], xl, preferred_element_type=jnp.float32)   # (N*H, Wl)
        term = (jnp.dot(th, rh_ref[dx], preferred_element_type=jnp.float32)
                + jnp.dot(tl, rl_ref[dx], preferred_element_type=jnp.float32))
        # init accumulator with first term + bias (no zeros init / late bias add)
        acc = term + bias if acc is None else acc + term                    # (N*H, Wout)

    out_ref[...] = jax.nn.sigmoid(acc)   # full-lane, unmasked vst


def point_matcher_forward(x_high_nchw, x_low_nchw, conv_w, conv_b):
    """x_high: (N, C, H, W), x_low: (N, C, Hl, Wl), conv_w: (1, 2C, 3, 3), conv_b: (1,)."""
    N, C, H, W = x_high_nchw.shape
    _, _, Hl, Wl = x_low_nchw.shape
    f32 = jnp.float32

    # Lane-dense output width (>=128 and a multiple of 128); only first W cols real.
    Wout = max(128, ((W + 127) // 128) * 128)

    # --- inputs: FREE contiguous reshapes of NCHW (no pad / transpose / copy) ---
    xh = x_high_nchw.astype(f32).reshape(N * C * H, W)      # rows = (b, c, h)
    xl = x_low_nchw.astype(f32).reshape(N * C * Hl, Wl)     # rows = (b, c, hl)

    # --- operators (weight-sized; in a real model these are built once at init) ---
    w = conv_w[0].astype(f32)            # (2C, 3, 3) indexed [cc, dy, dx]
    w_high, w_low = w[:C], w[C:]         # (C, 3, 3) each

    # High-path row-shift selectors: S_high[dy][h, r] = [r == h + dy - 1] (0 outside).
    S_high = jnp.asarray(
        np.stack([np.eye(H, k=dy - 1) for dy in range(3)]).astype(np.float32))   # (3, H, H)
    # Low-path row interp + dy shift: S_low[dy][h, rl] = Wh[h + dy - 1, rl] (0 outside).
    Wh_pad = np.pad(_interp_matrix(H, Hl), ((1, 1), (0, 0)))                      # (H+2, Hl)
    S_low = jnp.asarray(
        np.stack([Wh_pad[dy:dy + H] for dy in range(3)]).astype(np.float32))      # (3, H, Hl)
    # Low-path column interp (shifted per dx below).
    Ww_pad = np.pad(_interp_matrix(W, Wl), ((1, 1), (0, 0)))                      # (W+2, Wl)

    eye_n = jnp.eye(N, dtype=f32)
    lh_l, ll_l, rh_l, rl_l = [], [], [], []
    for dx in range(3):
        # LEFT ops: channel weights + dy shift/sum (+ row interp for low path)
        #           + zero padding + per-batch block-diagonal structure.
        a = jnp.einsum('cd,dhr->hcr', w_high[:, :, dx], S_high).reshape(H, C * H)
        b = jnp.einsum('cd,dhr->hcr', w_low[:, :, dx], S_low).reshape(H, C * Hl)
        lh_l.append(jnp.kron(eye_n, a))                    # (N*H, N*C*H)
        ll_l.append(jnp.kron(eye_n, b))                    # (N*H, N*C*Hl)
        # RIGHT ops: dx column shift (+ column interp for low path) + zero pad
        #            + lane padding to Wout (128-aligned, lane-dense output).
        rh_dx = np.zeros((W, Wout), np.float32)
        rh_dx[:, :W] = np.eye(W, k=1 - dx)                 # [w_in, w] = [w_in == w+dx-1]
        rl_dx = np.zeros((Wl, Wout), np.float32)
        rl_dx[:, :W] = Ww_pad[dx:dx + W].T                 # [wl, w]  = Ww[w+dx-1, wl]
        rh_l.append(jnp.asarray(rh_dx))
        rl_l.append(jnp.asarray(rl_dx))
    lh = jnp.stack(lh_l)       # (3, N*H, N*C*H)
    ll = jnp.stack(ll_l)       # (3, N*H, N*C*Hl)
    rh = jnp.stack(rh_l)       # (3, W,  Wout)
    rl = jnp.stack(rl_l)       # (3, Wl, Wout)

    bias = conv_b.reshape(1, 1).astype(f32)

    # VMEM limit sized from actual operand bytes (all f32), with headroom (item 9).
    total_bytes = 4 * (xh.size + xl.size + lh.size + ll.size + rh.size + rl.size
                       + N * H * Wout)
    vmem_limit = max(4 * 1024 * 1024, 2 * int(total_bytes))

    out = pl.pallas_call(
        point_matcher_kernel,
        out_shape=jax.ShapeDtypeStruct((N * H, Wout), f32),
        # Single invocation (no grid): batch is folded into sublanes, so there is
        # no per-grid-step overhead at this shape (review items 5/6).
        in_specs=[
            pl.BlockSpec(memory_space=pltpu.MemorySpace.VMEM),   # xh
            pl.BlockSpec(memory_space=pltpu.MemorySpace.VMEM),   # xl
            pl.BlockSpec(memory_space=pltpu.MemorySpace.VMEM),   # lh
            pl.BlockSpec(memory_space=pltpu.MemorySpace.VMEM),   # ll
            pl.BlockSpec(memory_space=pltpu.MemorySpace.VMEM),   # rh
            pl.BlockSpec(memory_space=pltpu.MemorySpace.VMEM),   # rl
            pl.BlockSpec(memory_space=pltpu.MemorySpace.SMEM),   # scalar bias
        ],
        out_specs=pl.BlockSpec(memory_space=pltpu.MemorySpace.VMEM),
        compiler_params=pltpu.CompilerParams(vmem_limit_bytes=vmem_limit),
    )(xh, xl, lh, ll, rh, rl, bias)

    # Strip the lane padding and restore PyTorch NCHW output shape (N, 1, H, W).
    return out[:, :W].reshape(N, 1, H, W)


def _reference(x_high_nchw, x_low_nchw, conv_w, conv_b):
    """Pure-JAX reference matching PyTorch semantics (bilinear upsample + conv + sigmoid)."""
    N, C, H, W = x_high_nchw.shape
    _, _, Hl, Wl = x_low_nchw.shape
    xh = jnp.transpose(x_high_nchw, (0, 2, 3, 1))
    xl = jnp.transpose(x_low_nchw, (0, 2, 3, 1))
    Wh = jnp.asarray(_interp_matrix(H, Hl))
    Ww = jnp.asarray(_interp_matrix(W, Wl))
    up = jnp.einsum('ph,nhwc->npwc', Wh, xl)
    up = jnp.einsum('qw,npwc->npqc', Ww, up)
    cat = jnp.concatenate([xh, up], axis=-1)                       # (N, H, W, 2C)
    w_hwio = jnp.transpose(conv_w, (2, 3, 1, 0))                   # (3, 3, 2C, 1)
    y = lax.conv_general_dilated(cat, w_hwio, window_strides=(1, 1),
                                 padding=((1, 1), (1, 1)),
                                 dimension_numbers=('NHWC', 'HWIO', 'NHWC'))
    y = jax.nn.sigmoid(y + conv_b.reshape(1, 1, 1, 1))
    return jnp.transpose(y, (0, 3, 1, 2))                          # (N, 1, H, W)


if __name__ == "__main__":
    key = jax.random.PRNGKey(0)
    k1, k2, k3, k4 = jax.random.split(key, 4)

    N, dim, H, W = 2, 4, 16, 16
    Hl, Wl = 8, 8

    x_high = jax.random.normal(k1, (N, dim, H, W), dtype=jnp.float32)
    x_low = jax.random.normal(k2, (N, dim, Hl, Wl), dtype=jnp.float32)

    # Deterministic synthetic Conv2d(2*dim, 1, 3, padding=1) parameters.
    conv_w = 0.1 * jax.random.normal(k3, (1, 2 * dim, 3, 3), dtype=jnp.float32)
    conv_b = 0.1 * jax.random.normal(k4, (1,), dtype=jnp.float32)

    out = jax.block_until_ready(point_matcher_forward(x_high, x_low, conv_w, conv_b))
    ref = jax.block_until_ready(_reference(x_high, x_low, conv_w, conv_b))

    assert out.shape == (N, 1, H, W)
    np.testing.assert_allclose(np.asarray(out), np.asarray(ref), atol=1e-4, rtol=1e-4)

    print("KERNEL_OK")
</pallas_src>

<mosaic_0001>
module attributes {stable_mosaic.version = 11 : i64} {
  func.func @point_matcher_kernel(%arg0: memref<128x16xf32, #tpu.memory_space<vmem>>, %arg1: memref<64x8xf32, #tpu.memory_space<vmem>>, %arg2: memref<3x32x128xf32, #tpu.memory_space<vmem>>, %arg3: memref<3x32x64xf32, #tpu.memory_space<vmem>>, %arg4: memref<3x16x128xf32, #tpu.memory_space<vmem>>, %arg5: memref<3x8x128xf32, #tpu.memory_space<vmem>>, %arg6: memref<1x1xf32, #tpu.memory_space<smem>>, %arg7: memref<32x128xf32, #tpu.memory_space<vmem>>) attributes {dimension_semantics = [], scalar_prefetch = 0 : i64, scratch_operands = 0 : i64, tpu.core_type = #tpu.core_type<tc>} {
    %c0 = arith.constant 0 : index
    %c0_0 = arith.constant 0 : index
    %0 = vector.load %arg0[%c0, %c0_0] : memref<128x16xf32, #tpu.memory_space<vmem>>, vector<128x16xf32>
    %c0_1 = arith.constant 0 : index
    %c0_2 = arith.constant 0 : index
    %1 = vector.load %arg1[%c0_1, %c0_2] : memref<64x8xf32, #tpu.memory_space<vmem>>, vector<64x8xf32>
    %c0_3 = arith.constant 0 : index
    %c0_4 = arith.constant 0 : index
    %2 = memref.load %arg6[%c0_3, %c0_4] : memref<1x1xf32, #tpu.memory_space<smem>>
    %c0_5 = arith.constant 0 : index
    %c0_6 = arith.constant 0 : index
    %c0_7 = arith.constant 0 : index
    %3 = vector.load %arg2[%c0_5, %c0_6, %c0_7] : memref<3x32x128xf32, #tpu.memory_space<vmem>>, vector<1x32x128xf32>
    %4 = vector.shape_cast %3 : vector<1x32x128xf32> to vector<32x128xf32>
    %cst = arith.constant dense<0.000000e+00> : vector<32x16xf32>
    %5 = tpu.matmul %4, %0, %cst {dimension_numbers = #tpu.dot_dimension_numbers<[1], [0], [0], [1], [0, 0, 1, 1], [], []>} : vector<32x128xf32>, vector<128x16xf32>, vector<32x16xf32> -> vector<32x16xf32>
    %c0_8 = arith.constant 0 : index
    %c0_9 = arith.constant 0 : index
    %c0_10 = arith.constant 0 : index
    %6 = vector.load %arg3[%c0_8, %c0_9, %c0_10] : memref<3x32x64xf32, #tpu.memory_space<vmem>>, vector<1x32x64xf32>
    %7 = vector.shape_cast %6 : vector<1x32x64xf32> to vector<32x64xf32>
    %cst_11 = arith.constant dense<0.000000e+00> : vector<32x8xf32>
    %8 = tpu.matmul %7, %1, %cst_11 {dimension_numbers = #tpu.dot_dimension_numbers<[1], [0], [0], [1], [0, 0, 1, 1], [], []>} : vector<32x64xf32>, vector<64x8xf32>, vector<32x8xf32> -> vector<32x8xf32>
    %c0_12 = arith.constant 0 : index
    %c0_13 = arith.constant 0 : index
    %c0_14 = arith.constant 0 : index
    %9 = vector.load %arg4[%c0_12, %c0_13, %c0_14] : memref<3x16x128xf32, #tpu.memory_space<vmem>>, vector<1x16x128xf32>
    %10 = vector.shape_cast %9 : vector<1x16x128xf32> to vector<16x128xf32>
    %cst_15 = arith.constant dense<0.000000e+00> : vector<32x128xf32>
    %11 = tpu.matmul %5, %10, %cst_15 {dimension_numbers = #tpu.dot_dimension_numbers<[1], [0], [0], [1], [0, 0, 1, 1], [], []>} : vector<32x16xf32>, vector<16x128xf32>, vector<32x128xf32> -> vector<32x128xf32>
    %c0_16 = arith.constant 0 : index
    %c0_17 = arith.constant 0 : index
    %c0_18 = arith.constant 0 : index
    %12 = vector.load %arg5[%c0_16, %c0_17, %c0_18] : memref<3x8x128xf32, #tpu.memory_space<vmem>>, vector<1x8x128xf32>
    %13 = vector.shape_cast %12 : vector<1x8x128xf32> to vector<8x128xf32>
    %cst_19 = arith.constant dense<0.000000e+00> : vector<32x128xf32>
    %14 = tpu.matmul %8, %13, %cst_19 {dimension_numbers = #tpu.dot_dimension_numbers<[1], [0], [0], [1], [0, 0, 1, 1], [], []>} : vector<32x8xf32>, vector<8x128xf32>, vector<32x128xf32> -> vector<32x128xf32>
    %15 = arith.addf %11, %14 : vector<32x128xf32>
    %16 = vector.broadcast %2 : f32 to vector<32x128xf32>
    %17 = arith.addf %15, %16 : vector<32x128xf32>
    %c1 = arith.constant 1 : index
    %c0_20 = arith.constant 0 : index
    %c0_21 = arith.constant 0 : index
    %18 = vector.load %arg2[%c1, %c0_20, %c0_21] : memref<3x32x128xf32, #tpu.memory_space<vmem>>, vector<1x32x128xf32>
    %19 = vector.shape_cast %18 : vector<1x32x128xf32> to vector<32x128xf32>
    %cst_22 = arith.constant dense<0.000000e+00> : vector<32x16xf32>
    %20 = tpu.matmul %19, %0, %cst_22 {dimension_numbers = #tpu.dot_dimension_numbers<[1], [0], [0], [1], [0, 0, 1, 1], [], []>} : vector<32x128xf32>, vector<128x16xf32>, vector<32x16xf32> -> vector<32x16xf32>
    %c1_23 = arith.constant 1 : index
    %c0_24 = arith.constant 0 : index
    %c0_25 = arith.constant 0 : index
    %21 = vector.load %arg3[%c1_23, %c0_24, %c0_25] : memref<3x32x64xf32, #tpu.memory_space<vmem>>, vector<1x32x64xf32>
    %22 = vector.shape_cast %21 : vector<1x32x64xf32> to vector<32x64xf32>
    %cst_26 = arith.constant dense<0.000000e+00> : vector<32x8xf32>
    %23 = tpu.matmul %22, %1, %cst_26 {dimension_numbers = #tpu.dot_dimension_numbers<[1], [0], [0], [1], [0, 0, 1, 1], [], []>} : vector<32x64xf32>, vector<64x8xf32>, vector<32x8xf32> -> vector<32x8xf32>
    %c1_27 = arith.constant 1 : index
    %c0_28 = arith.constant 0 : index
    %c0_29 = arith.constant 0 : index
    %24 = vector.load %arg4[%c1_27, %c0_28, %c0_29] : memref<3x16x128xf32, #tpu.memory_space<vmem>>, vector<1x16x128xf32>
    %25 = vector.shape_cast %24 : vector<1x16x128xf32> to vector<16x128xf32>
    %cst_30 = arith.constant dense<0.000000e+00> : vector<32x128xf32>
    %26 = tpu.matmul %20, %25, %cst_30 {dimension_numbers = #tpu.dot_dimension_numbers<[1], [0], [0], [1], [0, 0, 1, 1], [], []>} : vector<32x16xf32>, vector<16x128xf32>, vector<32x128xf32> -> vector<32x128xf32>
    %c1_31 = arith.constant 1 : index
    %c0_32 = arith.constant 0 : index
    %c0_33 = arith.constant 0 : index
    %27 = vector.load %arg5[%c1_31, %c0_32, %c0_33] : memref<3x8x128xf32, #tpu.memory_space<vmem>>, vector<1x8x128xf32>
    %28 = vector.shape_cast %27 : vector<1x8x128xf32> to vector<8x128xf32>
    %cst_34 = arith.constant dense<0.000000e+00> : vector<32x128xf32>
    %29 = tpu.matmul %23, %28, %cst_34 {dimension_numbers = #tpu.dot_dimension_numbers<[1], [0], [0], [1], [0, 0, 1, 1], [], []>} : vector<32x8xf32>, vector<8x128xf32>, vector<32x128xf32> -> vector<32x128xf32>
    %30 = arith.addf %26, %29 : vector<32x128xf32>
    %31 = arith.addf %17, %30 : vector<32x128xf32>
    %c2 = arith.constant 2 : index
    %c0_35 = arith.constant 0 : index
    %c0_36 = arith.constant 0 : index
    %32 = vector.load %arg2[%c2, %c0_35, %c0_36] : memref<3x32x128xf32, #tpu.memory_space<vmem>>, vector<1x32x128xf32>
    %33 = vector.shape_cast %32 : vector<1x32x128xf32> to vector<32x128xf32>
    %cst_37 = arith.constant dense<0.000000e+00> : vector<32x16xf32>
    %34 = tpu.matmul %33, %0, %cst_37 {dimension_numbers = #tpu.dot_dimension_numbers<[1], [0], [0], [1], [0, 0, 1, 1], [], []>} : vector<32x128xf32>, vector<128x16xf32>, vector<32x16xf32> -> vector<32x16xf32>
    %c2_38 = arith.constant 2 : index
    %c0_39 = arith.constant 0 : index
    %c0_40 = arith.constant 0 : index
    %35 = vector.load %arg3[%c2_38, %c0_39, %c0_40] : memref<3x32x64xf32, #tpu.memory_space<vmem>>, vector<1x32x64xf32>
    %36 = vector.shape_cast %35 : vector<1x32x64xf32> to vector<32x64xf32>
    %cst_41 = arith.constant dense<0.000000e+00> : vector<32x8xf32>
    %37 = tpu.matmul %36, %1, %cst_41 {dimension_numbers = #tpu.dot_dimension_numbers<[1], [0], [0], [1], [0, 0, 1, 1], [], []>} : vector<32x64xf32>, vector<64x8xf32>, vector<32x8xf32> -> vector<32x8xf32>
    %c2_42 = arith.constant 2 : index
    %c0_43 = arith.constant 0 : index
    %c0_44 = arith.constant 0 : index
    %38 = vector.load %arg4[%c2_42, %c0_43, %c0_44] : memref<3x16x128xf32, #tpu.memory_space<vmem>>, vector<1x16x128xf32>
    %39 = vector.shape_cast %38 : vector<1x16x128xf32> to vector<16x128xf32>
    %cst_45 = arith.constant dense<0.000000e+00> : vector<32x128xf32>
    %40 = tpu.matmul %34, %39, %cst_45 {dimension_numbers = #tpu.dot_dimension_numbers<[1], [0], [0], [1], [0, 0, 1, 1], [], []>} : vector<32x16xf32>, vector<16x128xf32>, vector<32x128xf32> -> vector<32x128xf32>
    %c2_46 = arith.constant 2 : index
    %c0_47 = arith.constant 0 : index
    %c0_48 = arith.constant 0 : index
    %41 = vector.load %arg5[%c2_46, %c0_47, %c0_48] : memref<3x8x128xf32, #tpu.memory_space<vmem>>, vector<1x8x128xf32>
    %42 = vector.shape_cast %41 : vector<1x8x128xf32> to vector<8x128xf32>
    %cst_49 = arith.constant dense<0.000000e+00> : vector<32x128xf32>
    %43 = tpu.matmul %37, %42, %cst_49 {dimension_numbers = #tpu.dot_dimension_numbers<[1], [0], [0], [1], [0, 0, 1, 1], [], []>} : vector<32x8xf32>, vector<8x128xf32>, vector<32x128xf32> -> vector<32x128xf32>
    %44 = arith.addf %40, %43 : vector<32x128xf32>
    %45 = arith.addf %31, %44 : vector<32x128xf32>
    %46 = arith.negf %45 : vector<32x128xf32>
    %47 = math.exp %46 : vector<32x128xf32>
    %cst_50 = arith.constant 1.000000e+00 : f32
    %48 = vector.broadcast %cst_50 : f32 to vector<32x128xf32>
    %49 = arith.addf %48, %47 : vector<32x128xf32>
    %50 = arith.divf %48, %49 : vector<32x128xf32>
    %c0_51 = arith.constant 0 : index
    %c0_52 = arith.constant 0 : index
    %51 = vector.load %arg7[%c0_51, %c0_52] : memref<32x128xf32, #tpu.memory_space<vmem>>, vector<32x128xf32>
    tpu.vector_store %arg7[%c0_51, %c0_52], %50 {strides = array<i32>} : memref<32x128xf32, #tpu.memory_space<vmem>>, vector<32x128xf32>,
    return
  }
}

</mosaic_0001>

<llo_original>
// kernel: tpu_custom_call.1
$region0: #{tpu_custom_call.1}
  #allocation0 [shape = 'u32[]', space=smem, size = 0x4, offset = 0x4, fixed_abs, tag = 'smem constant byte address 0x4 - core index']
  #allocation1 [shape = 'u32[72,128]{1,0:T(1,128)}', space=vmem, size = 0x9000, scoped, tag = 'internal scratch']
  #allocation2 [shape = 'f32[1,1]{1,0:T(1,128)S(6)}', space=smem, size = 0x200, scoped, tag = 'scoped memory for tpu_custom_call.1']
  %s0 = inlined_call_operand.vmem [shape: f32[128,16], index: 0, kind: input, shape index: {}]
  %s1 = inlined_call_operand.vmem [shape: f32[64,8], index: 1, kind: input, shape index: {}]
  %s2 = inlined_call_operand.vmem [shape: f32[3,32,128], index: 2, kind: input, shape index: {}]
  %s3 = inlined_call_operand.vmem [shape: f32[3,32,64], index: 3, kind: input, shape index: {}]
  %s4 = inlined_call_operand.hbm [shape: f32[3,16,128], index: 4, kind: input, shape index: {}]
  %s5 = inlined_call_operand.hbm [shape: f32[3,8,128], index: 5, kind: input, shape index: {}]
  %s6 = inlined_call_operand.<no memory space> [shape: f32[1,1], index: 6, kind: input, shape index: {}]
  %s7 = inlined_call_operand.hbm [shape: f32[32,128], index: 7, kind: output, shape index: {}]
  %s8 = sld [smem:[#allocation0]]
  $region46: #{tpu_custom_call.1} parent=0
    _
  %s10 = ssub.s32 1, %s8
  %s11 = scalar_select 0, %s10, %s8
  %12 = sst [smem:[#allocation2]] %s6
  $region1: #{tpu_custom_call.1} parent=0
    #allocation3 [shape = 'u8[24576]{0}', space=vmem, size = 0x6000, scoped, tag = 'input window, operand 4, single buffered']
    #allocation4 [shape = 's32[1]{0}', space=sflag, size = 0x4, scoped, tag = 'scoped memory for tpu_custom_call.1']
    #allocation5 [shape = 's32[1]{0}', space=sflag, size = 0x4, scoped, tag = 'scoped memory for tpu_custom_call.1']
    #allocation6 [shape = 'u8[12288]{0}', space=vmem, size = 0x3000, scoped, tag = 'input window, operand 5, single buffered']
    #allocation7 [shape = 's32[1]{0}', space=sflag, size = 0x4, scoped, tag = 'scoped memory for tpu_custom_call.1']
    #allocation8 [shape = 'u8[16384]{0}', space=vmem, size = 0x4000, scoped, tag = 'output window, operand 0, single buffered']
    %13 = vsyncpa [#allocation4], 0
    %14 = vsyncpa [#allocation7], 0
    %15 = vsyncpa [#allocation5], 0
    // Predicated region
    $region2: #{tpu_custom_call.1} parent=1 // pred_check
      _
    $region3: #{tpu_custom_call.1} parent=1 // pred_check_branch
      %17 = sbr.rel (0) target = $region5
    $region4: #{tpu_custom_call.1} parent=1 // pred_region
      _
    $region5: #{tpu_custom_call.1} parent=1 // pred_fallthru
      _
    // Predicated region
    $region6: #{tpu_custom_call.1} parent=1 // pred_check
      _
    $region7: #{tpu_custom_call.1} parent=1 // pred_check_branch
      %19 = sbr.rel (0) target = $region9
    $region8: #{tpu_custom_call.1} parent=1 // pred_region
      _
    $region9: #{tpu_custom_call.1} parent=1 // pred_fallthru
      _
    // Predicated region
    $region10: #{tpu_custom_call.1} parent=1 // pred_check
      _
    $region11: #{tpu_custom_call.1} parent=1 // pred_check_branch
      %21 = sbr.rel (0) target = $region13
    $region12: #{tpu_custom_call.1} parent=1 // pred_region
      _
    $region13: #{tpu_custom_call.1} parent=1 // pred_fallthru
      _
    // Predicated region
    $region14: #{tpu_custom_call.1} parent=1 // pred_check
      _
    $region15: #{tpu_custom_call.1} parent=1 // pred_check_branch
      %23 = sbr.rel (0) target = $region17
    $region16: #{tpu_custom_call.1} parent=1 // pred_region
      _
    $region17: #{tpu_custom_call.1} parent=1 // pred_fallthru
      _
    // Predicated region
    $region18: #{tpu_custom_call.1} parent=1 // pred_check
      _
    $region19: #{tpu_custom_call.1} parent=1 // pred_check_branch
      %25 = sbr.rel (0) target = $region21
    $region20: #{tpu_custom_call.1} parent=1 // pred_region
      %27 = vsyncadd [#allocation4], 0
      %s28 = sshll.u32 %s4, 4
      %s29 = int_to_ptr.hbm [resolvable:$true] %s28
      %s30 = sshll.u32 [#allocation3], 4
      %s31 = int_to_ptr.vmem [resolvable:$true] %s30
      %36 = dma.hbm_to_vmem [thread:$0]  %s29, 768, %s31, [#allocation4], 128, 128, 8
    $region21: #{tpu_custom_call.1} parent=1 // pred_fallthru
      _
    // Predicated region
    $region22: #{tpu_custom_call.1} parent=1 // pred_check
      _
    $region23: #{tpu_custom_call.1} parent=1 // pred_check_branch
      %38 = sbr.rel (0) target = $region25
    $region24: #{tpu_custom_call.1} parent=1 // pred_region
      %40 = vsyncadd [#allocation7], 0
      %s41 = sshll.u32 %s5, 4
      %s42 = int_to_ptr.hbm [resolvable:$true] %s41
      %s43 = sshll.u32 [#allocation6], 4
      %s44 = int_to_ptr.vmem [resolvable:$true] %s43
      %49 = dma.hbm_to_vmem [thread:$0]  %s42, 384, %s44, [#allocation7], 128, 128, 8
    $region25: #{tpu_custom_call.1} parent=1 // pred_fallthru
      _
    // Predicated region
    $region26: #{tpu_custom_call.1} parent=1 // pred_check
      _
    $region27: #{tpu_custom_call.1} parent=1 // pred_check_branch
      %51 = sbr.rel (0) target = $region29
    $region28: #{tpu_custom_call.1} parent=1 // pred_region
      _
    $region29: #{tpu_custom_call.1} parent=1 // pred_fallthru
      _
    // Predicated region
    $region30: #{tpu_custom_call.1} parent=1 // pred_check
      _
    $region31: #{tpu_custom_call.1} parent=1 // pred_check_branch
      %53 = sbr.rel (0) target = $region33
    $region32: #{tpu_custom_call.1} parent=1 // pred_region
      %55 = dma.done [#allocation4], 768
    $region33: #{tpu_custom_call.1} parent=1 // pred_fallthru
      _
    // Predicated region
    $region34: #{tpu_custom_call.1} parent=1 // pred_check
      _
    $region35: #{tpu_custom_call.1} parent=1 // pred_check_branch
      %57 = sbr.rel (0) target = $region37
    $region36: #{tpu_custom_call.1} parent=1 // pred_region
      %59 = dma.done [#allocation7], 384
    $region37: #{tpu_custom_call.1} parent=1 // pred_fallthru
      _
    %v60 = vld [vmem:[%s0] sm:$0xff]
    %v61 = vld [vmem:[%s0 + $0x8] sm:$0xff]
    %v62 = vld [vmem:[%s0 + $0x10] sm:$0xff]
    %v63 = vld [vmem:[%s0 + $0x18] sm:$0xff]
    %v64 = vld [vmem:[%s0 + $0x20] sm:$0xff]
    %v65 = vld [vmem:[%s0 + $0x28] sm:$0xff]
    %v66 = vld [vmem:[%s0 + $0x30] sm:$0xff]
    %v67 = vld [vmem:[%s0 + $0x38] sm:$0xff]
    %v68 = vld [vmem:[%s0 + $0x40] sm:$0xff]
    %v69 = vld [vmem:[%s0 + $0x48] sm:$0xff]
    %v70 = vld [vmem:[%s0 + $0x50] sm:$0xff]
    %v71 = vld [vmem:[%s0 + $0x58] sm:$0xff]
    %v72 = vld [vmem:[%s0 + $0x60] sm:$0xff]
    %v73 = vld [vmem:[%s0 + $0x68] sm:$0xff]
    %v74 = vld [vmem:[%s0 + $0x70] sm:$0xff]
    %v75 = vld [vmem:[%s0 + $0x78] sm:$0xff]
    %v76 = vld [vmem:[%s1] sm:$0xff]
    %v77 = vld [vmem:[%s1 + $0x8] sm:$0xff]
    %v78 = vld [vmem:[%s1 + $0x10] sm:$0xff]
    %v79 = vld [vmem:[%s1 + $0x18] sm:$0xff]
    %v80 = vld [vmem:[%s1 + $0x20] sm:$0xff]
    %v81 = vld [vmem:[%s1 + $0x28] sm:$0xff]
    %v82 = vld [vmem:[%s1 + $0x30] sm:$0xff]
    %v83 = vld [vmem:[%s1 + $0x38] sm:$0xff]
    %s84 = sld [smem:[#allocation2]]
    %v85 = vld [vmem:[%s2] sm:$0xff]
    %v86 = vld [vmem:[%s2 + $0x8] sm:$0xff]
    %v87 = vld [vmem:[%s2 + $0x10] sm:$0xff]
    %v88 = vld [vmem:[%s2 + $0x18] sm:$0xff]
    %89 = vmatpush.msra.mxu0 %v75
    %90 = vmatpush.msra.mxu0 %v74
    %91 = vmatpush.msra.mxu0 %v73
    %92 = vmatpush.msra.mxu0 %v72
    %93 = vmatpush.msra.mxu0 %v71
    %94 = vmatpush.msra.mxu0 %v70
    %95 = vmatpush.msra.mxu0 %v69
    %96 = vmatpush.msra.mxu0 %v68
    %97 = vmatpush.msra.mxu0 %v67
    %98 = vmatpush.msra.mxu0 %v66
    %99 = vmatpush.msra.mxu0 %v65
    %100 = vmatpush.msra.mxu0 %v64
    %101 = vmatpush.msra.mxu0 %v63
    %102 = vmatpush.msra.mxu0 %v62
    %103 = vmatpush.msra.mxu0 %v61
    %104 = vmatpush.msra.mxu0 %v60
    %105 = vmatmul.f32.gmra.mxu0 %v85
    %v106 = vpop.f32.mrf.mxu0
    %v107 = vadd.f32 0.0, %v106
    %108 = vmatmul.f32.gmra.mxu0 %v86
    %v109 = vpop.f32.mrf.mxu0
    %v110 = vadd.f32 0.0, %v109
    %111 = vmatmul.f32.gmra.mxu0 %v87
    %v112 = vpop.f32.mrf.mxu0
    %v113 = vadd.f32 0.0, %v112
    %114 = vmatmul.f32.gmra.mxu0 %v88
    %v115 = vpop.f32.mrf.mxu0
    %v116 = vadd.f32 0.0, %v115
    %117 = vdwg.mxu0
    %v118 = vld [vmem:[%s3] sm:$0xff]
    %v119 = vld [vmem:[%s3 + $0x8] sm:$0xff]
    %v120 = vld [vmem:[%s3 + $0x10] sm:$0xff]
    %v121 = vld [vmem:[%s3 + $0x18] sm:$0xff]
    %vm122 = vcmask 523264
    %v124 = vsel %vm122, %v118, 0
    %v127 = vsel %vm122, %v119, 0
    %v130 = vsel %vm122, %v120, 0
    %v133 = vsel %vm122, %v121, 0
    %135 = vmatpush.msra.mxu0 0.0
    %136 = vmatpush.msra.mxu0 0.0
    %137 = vmatpush.msra.mxu0 0.0
    %138 = vmatpush.msra.mxu0 0.0
    %139 = vmatpush.msra.mxu0 0.0
    %140 = vmatpush.msra.mxu0 0.0
    %141 = vmatpush.msra.mxu0 0.0
    %142 = vmatpush.msra.mxu0 0.0
    %143 = vmatpush.msra.mxu0 %v83
    %144 = vmatpush.msra.mxu0 %v82
    %145 = vmatpush.msra.mxu0 %v81
    %146 = vmatpush.msra.mxu0 %v80
    %147 = vmatpush.msra.mxu0 %v79
    %148 = vmatpush.msra.mxu0 %v78
    %149 = vmatpush.msra.mxu0 %v77
    %150 = vmatpush.msra.mxu0 %v76
    %151 = vmatmul.f32.gmra.mxu0 %v124
    %v152 = vpop.f32.mrf.mxu0
    %v153 = vadd.f32 0.0, %v152
    %154 = vmatmul.f32.gmra.mxu0 %v127
    %v155 = vpop.f32.mrf.mxu0
    %v156 = vadd.f32 0.0, %v155
    %157 = vmatmul.f32.gmra.mxu0 %v130
    %v158 = vpop.f32.mrf.mxu0
    %v159 = vadd.f32 0.0, %v158
    %160 = vmatmul.f32.gmra.mxu0 %v133
    %v161 = vpop.f32.mrf.mxu0
    %v162 = vadd.f32 0.0, %v161
    %163 = vdwg.mxu0
    %v164 = vld [vmem:[#allocation3] sm:$0xff]
    %v165 = vld [vmem:[#allocation3 + $0x8] sm:$0xff]
    %v166 = vld [vmem:[#allocation6] sm:$0xff]
    %vm167 = vcmask 64512
    %v169 = vsel %vm167, %v153, 0
    %v172 = vsel %vm167, %v156, 0
    %v175 = vsel %vm167, %v159, 0
    %v178 = vsel %vm167, %v162, 0
    %180 = vmatpush.msra.mxu0 0.0
    %181 = vmatpush.msra.mxu0 0.0
    %182 = vmatpush.msra.mxu0 0.0
    %183 = vmatpush.msra.mxu0 0.0
    %184 = vmatpush.msra.mxu0 0.0
    %185 = vmatpush.msra.mxu0 0.0
    %186 = vmatpush.msra.mxu0 0.0
    %187 = vmatpush.msra.mxu0 0.0
    %188 = vmatpush.msra.mxu0 0.0
    %189 = vmatpush.msra.mxu0 0.0
    %190 = vmatpush.msra.mxu0 0.0
    %191 = vmatpush.msra.mxu0 0.0
    %192 = vmatpush.msra.mxu0 0.0
    %193 = vmatpush.msra.mxu0 0.0
    %194 = vmatpush.msra.mxu0 0.0
    %195 = vmatpush.msra.mxu0 %v166
    %196 = vmatmul.f32.gmra.mxu0 %v169
    %v197 = vpop.f32.mrf.mxu0
    %v198 = vadd.f32 0.0, %v197
    %199 = vmatmul.f32.gmra.mxu0 %v172
    %v200 = vpop.f32.mrf.mxu0
    %v201 = vadd.f32 0.0, %v200
    %202 = vmatmul.f32.gmra.mxu0 %v175
    %v203 = vpop.f32.mrf.mxu0
    %v204 = vadd.f32 0.0, %v203
    %205 = vmatmul.f32.gmra.mxu0 %v178
    %v206 = vpop.f32.mrf.mxu0
    %v207 = vadd.f32 0.0, %v206
    %208 = vdwg.mxu0
    %vm209 = vcmask 130048
    %v211 = vsel %vm209, %v107, 0
    %v214 = vsel %vm209, %v110, 0
    %v217 = vsel %vm209, %v113, 0
    %v220 = vsel %vm209, %v116, 0
    %222 = vmatpush.msra.mxu0 0.0
    %223 = vmatpush.msra.mxu0 0.0
    %224 = vmatpush.msra.mxu0 0.0
    %225 = vmatpush.msra.mxu0 0.0
    %226 = vmatpush.msra.mxu0 0.0
    %227 = vmatpush.msra.mxu0 0.0
    %228 = vmatpush.msra.mxu0 0.0
    %229 = vmatpush.msra.mxu0 0.0
    %230 = vmatpush.msra.mxu0 0.0
    %231 = vmatpush.msra.mxu0 0.0
    %232 = vmatpush.msra.mxu0 0.0
    %233 = vmatpush.msra.mxu0 0.0
    %234 = vmatpush.msra.mxu0 0.0
    %235 = vmatpush.msra.mxu0 0.0
    %236 = vmatpush.msra.mxu0 %v165
    %237 = vmatpush.msra.mxu0 %v164
    %238 = vmatmul.f32.gmra.mxu0 %v211
    %v239 = vpop.f32.mrf.mxu0
    %v240 = vadd.f32 %v198, %v239
    %241 = vmatmul.f32.gmra.mxu0 %v214
    %v242 = vpop.f32.mrf.mxu0
    %v243 = vadd.f32 %v201, %v242
    %244 = vmatmul.f32.gmra.mxu0 %v217
    %v245 = vpop.f32.mrf.mxu0
    %v246 = vadd.f32 %v204, %v245
    %247 = vmatmul.f32.gmra.mxu0 %v220
    %v248 = vpop.f32.mrf.mxu0
    %v249 = vadd.f32 %v207, %v248
    %250 = vdwg.mxu0
    %v251 = vstv %s84
    %v252 = vadd.f32 %v240, %v251
    %v253 = vadd.f32 %v243, %v251
    %v254 = vadd.f32 %v246, %v251
    %v255 = vadd.f32 %v249, %v251
    %s256 = scalar_lea.vmem %s2, 32
    %v257 = vld [vmem:[%s256] sm:$0xff]
    %v258 = vld [vmem:[%s256 + $0x8] sm:$0xff]
    %v259 = vld [vmem:[%s256 + $0x10] sm:$0xff]
    %v260 = vld [vmem:[%s256 + $0x18] sm:$0xff]
    %261 = vmatpush.msra.mxu0 %v75
    %262 = vmatpush.msra.mxu0 %v74
    %263 = vmatpush.msra.mxu0 %v73
    %264 = vmatpush.msra.mxu0 %v72
    %265 = vmatpush.msra.mxu0 %v71
    %266 = vmatpush.msra.mxu0 %v70
    %267 = vmatpush.msra.mxu0 %v69
    %268 = vmatpush.msra.mxu0 %v68
    %269 = vmatpush.msra.mxu0 %v67
    %270 = vmatpush.msra.mxu0 %v66
    %271 = vmatpush.msra.mxu0 %v65
    %272 = vmatpush.msra.mxu0 %v64
    %273 = vmatpush.msra.mxu0 %v63
    %274 = vmatpush.msra.mxu0 %v62
    %275 = vmatpush.msra.mxu0 %v61
    %276 = vmatpush.msra.mxu0 %v60
    %277 = vmatmul.f32.gmra.mxu0 %v257
    %v278 = vpop.f32.mrf.mxu0
    %v279 = vadd.f32 0.0, %v278
    %280 = vmatmul.f32.gmra.mxu0 %v258
    %v281 = vpop.f32.mrf.mxu0
    %v282 = vadd.f32 0.0, %v281
    %283 = vmatmul.f32.gmra.mxu0 %v259
    %v284 = vpop.f32.mrf.mxu0
    %v285 = vadd.f32 0.0, %v284
    %286 = vmatmul.f32.gmra.mxu0 %v260
    %v287 = vpop.f32.mrf.mxu0
    %v288 = vadd.f32 0.0, %v287
    %289 = vdwg.mxu0
    %s290 = scalar_lea.vmem %s3, 32
    %v291 = vld [vmem:[%s290] sm:$0xff]
    %v292 = vld [vmem:[%s290 + $0x8] sm:$0xff]
    %v293 = vld [vmem:[%s290 + $0x10] sm:$0xff]
    %v294 = vld [vmem:[%s290 + $0x18] sm:$0xff]
    %v296 = vsel %vm122, %v291, 0
    %v299 = vsel %vm122, %v292, 0
    %v302 = vsel %vm122, %v293, 0
    %v305 = vsel %vm122, %v294, 0
    %307 = vmatpush.msra.mxu0 0.0
    %308 = vmatpush.msra.mxu0 0.0
    %309 = vmatpush.msra.mxu0 0.0
    %310 = vmatpush.msra.mxu0 0.0
    %311 = vmatpush.msra.mxu0 0.0
    %312 = vmatpush.msra.mxu0 0.0
    %313 = vmatpush.msra.mxu0 0.0
    %314 = vmatpush.msra.mxu0 0.0
    %315 = vmatpush.msra.mxu0 %v83
    %316 = vmatpush.msra.mxu0 %v82
    %317 = vmatpush.msra.mxu0 %v81
    %318 = vmatpush.msra.mxu0 %v80
    %319 = vmatpush.msra.mxu0 %v79
    %320 = vmatpush.msra.mxu0 %v78
    %321 = vmatpush.msra.mxu0 %v77
    %322 = vmatpush.msra.mxu0 %v76
    %323 = vmatmul.f32.gmra.mxu0 %v296
    %v324 = vpop.f32.mrf.mxu0
    %v325 = vadd.f32 0.0, %v324
    %326 = vmatmul.f32.gmra.mxu0 %v299
    %v327 = vpop.f32.mrf.mxu0
    %v328 = vadd.f32 0.0, %v327
    %329 = vmatmul.f32.gmra.mxu0 %v302
    %v330 = vpop.f32.mrf.mxu0
    %v331 = vadd.f32 0.0, %v330
    %332 = vmatmul.f32.gmra.mxu0 %v305
    %v333 = vpop.f32.mrf.mxu0
    %v334 = vadd.f32 0.0, %v333
    %335 = vdwg.mxu0
    %s336 = scalar_lea.vmem [#allocation3], 16
    %v337 = vld [vmem:[%s336] sm:$0xff]
    %v338 = vld [vmem:[%s336 + $0x8] sm:$0xff]
    %s339 = scalar_lea.vmem [#allocation6], 8
    %v340 = vld [vmem:[%s339] sm:$0xff]
    %v342 = vsel %vm167, %v325, 0
    %v345 = vsel %vm167, %v328, 0
    %v348 = vsel %vm167, %v331, 0
    %v351 = vsel %vm167, %v334, 0
    %353 = vmatpush.msra.mxu0 0.0
    %354 = vmatpush.msra.mxu0 0.0
    %355 = vmatpush.msra.mxu0 0.0
    %356 = vmatpush.msra.mxu0 0.0
    %357 = vmatpush.msra.mxu0 0.0
    %358 = vmatpush.msra.mxu0 0.0
    %359 = vmatpush.msra.mxu0 0.0
    %360 = vmatpush.msra.mxu0 0.0
    %361 = vmatpush.msra.mxu0 0.0
    %362 = vmatpush.msra.mxu0 0.0
    %363 = vmatpush.msra.mxu0 0.0
    %364 = vmatpush.msra.mxu0 0.0
    %365 = vmatpush.msra.mxu0 0.0
    %366 = vmatpush.msra.mxu0 0.0
    %367 = vmatpush.msra.mxu0 0.0
    %368 = vmatpush.msra.mxu0 %v340
    %369 = vmatmul.f32.gmra.mxu0 %v342
    %v370 = vpop.f32.mrf.mxu0
    %v371 = vadd.f32 0.0, %v370
    %372 = vmatmul.f32.gmra.mxu0 %v345
    %v373 = vpop.f32.mrf.mxu0
    %v374 = vadd.f32 0.0, %v373
    %375 = vmatmul.f32.gmra.mxu0 %v348
    %v376 = vpop.f32.mrf.mxu0
    %v377 = vadd.f32 0.0, %v376
    %378 = vmatmul.f32.gmra.mxu0 %v351
    %v379 = vpop.f32.mrf.mxu0
    %v380 = vadd.f32 0.0, %v379
    %381 = vdwg.mxu0
    %v383 = vsel %vm209, %v279, 0
    %v386 = vsel %vm209, %v282, 0
    %v389 = vsel %vm209, %v285, 0
    %v392 = vsel %vm209, %v288, 0
    %394 = vmatpush.msra.mxu0 0.0
    %395 = vmatpush.msra.mxu0 0.0
    %396 = vmatpush.msra.mxu0 0.0
    %397 = vmatpush.msra.mxu0 0.0
    %398 = vmatpush.msra.mxu0 0.0
    %399 = vmatpush.msra.mxu0 0.0
    %400 = vmatpush.msra.mxu0 0.0
    %401 = vmatpush.msra.mxu0 0.0
    %402 = vmatpush.msra.mxu0 0.0
    %403 = vmatpush.msra.mxu0 0.0
    %404 = vmatpush.msra.mxu0 0.0
    %405 = vmatpush.msra.mxu0 0.0
    %406 = vmatpush.msra.mxu0 0.0
    %407 = vmatpush.msra.mxu0 0.0
    %408 = vmatpush.msra.mxu0 %v338
    %409 = vmatpush.msra.mxu0 %v337
    %410 = vmatmul.f32.gmra.mxu0 %v383
    %v411 = vpop.f32.mrf.mxu0
    %v412 = vadd.f32 %v371, %v411
    %413 = vmatmul.f32.gmra.mxu0 %v386
    %v414 = vpop.f32.mrf.mxu0
    %v415 = vadd.f32 %v374, %v414
    %416 = vmatmul.f32.gmra.mxu0 %v389
    %v417 = vpop.f32.mrf.mxu0
    %v418 = vadd.f32 %v377, %v417
    %419 = vmatmul.f32.gmra.mxu0 %v392
    %v420 = vpop.f32.mrf.mxu0
    %v421 = vadd.f32 %v380, %v420
    %422 = vdwg.mxu0
    %v423 = vadd.f32 %v252, %v412
    %v424 = vadd.f32 %v253, %v415
    %v425 = vadd.f32 %v254, %v418
    %v426 = vadd.f32 %v255, %v421
    %s427 = scalar_lea.vmem %s2, 64
    %v428 = vld [vmem:[%s427] sm:$0xff]
    %v429 = vld [vmem:[%s427 + $0x8] sm:$0xff]
    %v430 = vld [vmem:[%s427 + $0x10] sm:$0xff]
    %v431 = vld [vmem:[%s427 + $0x18] sm:$0xff]
    %432 = vmatpush.msra.mxu0 %v75
    %433 = vmatpush.msra.mxu0 %v74
    %434 = vmatpush.msra.mxu0 %v73
    %435 = vmatpush.msra.mxu0 %v72
    %436 = vmatpush.msra.mxu0 %v71
    %437 = vmatpush.msra.mxu0 %v70
    %438 = vmatpush.msra.mxu0 %v69
    %439 = vmatpush.msra.mxu0 %v68
    %440 = vmatpush.msra.mxu0 %v67
    %441 = vmatpush.msra.mxu0 %v66
    %442 = vmatpush.msra.mxu0 %v65
    %443 = vmatpush.msra.mxu0 %v64
    %444 = vmatpush.msra.mxu0 %v63
    %445 = vmatpush.msra.mxu0 %v62
    %446 = vmatpush.msra.mxu0 %v61
    %447 = vmatpush.msra.mxu0 %v60
    %448 = vmatmul.f32.gmra.mxu0 %v428
    %v449 = vpop.f32.mrf.mxu0
    %v450 = vadd.f32 0.0, %v449
    %451 = vmatmul.f32.gmra.mxu0 %v429
    %v452 = vpop.f32.mrf.mxu0
    %v453 = vadd.f32 0.0, %v452
    %454 = vmatmul.f32.gmra.mxu0 %v430
    %v455 = vpop.f32.mrf.mxu0
    %v456 = vadd.f32 0.0, %v455
    %457 = vmatmul.f32.gmra.mxu0 %v431
    %v458 = vpop.f32.mrf.mxu0
    %v459 = vadd.f32 0.0, %v458
    %460 = vdwg.mxu0
    %s461 = scalar_lea.vmem %s3, 64
    %v462 = vld [vmem:[%s461] sm:$0xff]
    %v463 = vld [vmem:[%s461 + $0x8] sm:$0xff]
    %v464 = vld [vmem:[%s461 + $0x10] sm:$0xff]
    %v465 = vld [vmem:[%s461 + $0x18] sm:$0xff]
    %v467 = vsel %vm122, %v462, 0
    %v470 = vsel %vm122, %v463, 0
    %v473 = vsel %vm122, %v464, 0
    %v476 = vsel %vm122, %v465, 0
    %478 = vmatpush.msra.mxu0 0.0
    %479 = vmatpush.msra.mxu0 0.0
    %480 = vmatpush.msra.mxu0 0.0
    %481 = vmatpush.msra.mxu0 0.0
    %482 = vmatpush.msra.mxu0 0.0
    %483 = vmatpush.msra.mxu0 0.0
    %484 = vmatpush.msra.mxu0 0.0
    %485 = vmatpush.msra.mxu0 0.0
    %486 = vmatpush.msra.mxu0 %v83
    %487 = vmatpush.msra.mxu0 %v82
    %488 = vmatpush.msra.mxu0 %v81
    %489 = vmatpush.msra.mxu0 %v80
    %490 = vmatpush.msra.mxu0 %v79
    %491 = vmatpush.msra.mxu0 %v78
    %492 = vmatpush.msra.mxu0 %v77
    %493 = vmatpush.msra.mxu0 %v76
    %494 = vmatmul.f32.gmra.mxu0 %v467
    %v495 = vpop.f32.mrf.mxu0
    %v496 = vadd.f32 0.0, %v495
    %497 = vmatmul.f32.gmra.mxu0 %v470
    %v498 = vpop.f32.mrf.mxu0
    %v499 = vadd.f32 0.0, %v498
    %500 = vmatmul.f32.gmra.mxu0 %v473
    %v501 = vpop.f32.mrf.mxu0
    %v502 = vadd.f32 0.0, %v501
    %503 = vmatmul.f32.gmra.mxu0 %v476
    %v504 = vpop.f32.mrf.mxu0
    %v505 = vadd.f32 0.0, %v504
    %506 = vdwg.mxu0
    %s507 = scalar_lea.vmem [#allocation3], 32
    %v508 = vld [vmem:[%s507] sm:$0xff]
    %v509 = vld [vmem:[%s507 + $0x8] sm:$0xff]
    %s510 = scalar_lea.vmem [#allocation6], 16
    %v511 = vld [vmem:[%s510] sm:$0xff]
    %v513 = vsel %vm167, %v496, 0
    %v516 = vsel %vm167, %v499, 0
    %v519 = vsel %vm167, %v502, 0
    %v522 = vsel %vm167, %v505, 0
    %524 = vmatpush.msra.mxu0 0.0
    %525 = vmatpush.msra.mxu0 0.0
    %526 = vmatpush.msra.mxu0 0.0
    %527 = vmatpush.msra.mxu0 0.0
    %528 = vmatpush.msra.mxu0 0.0
    %529 = vmatpush.msra.mxu0 0.0
    %530 = vmatpush.msra.mxu0 0.0
    %531 = vmatpush.msra.mxu0 0.0
    %532 = vmatpush.msra.mxu0 0.0
    %533 = vmatpush.msra.mxu0 0.0
    %534 = vmatpush.msra.mxu0 0.0
    %535 = vmatpush.msra.mxu0 0.0
    %536 = vmatpush.msra.mxu0 0.0
    %537 = vmatpush.msra.mxu0 0.0
    %538 = vmatpush.msra.mxu0 0.0
    %539 = vmatpush.msra.mxu0 %v511
    %540 = vmatmul.f32.gmra.mxu0 %v513
    %v541 = vpop.f32.mrf.mxu0
    %v542 = vadd.f32 0.0, %v541
    %543 = vmatmul.f32.gmra.mxu0 %v516
    %v544 = vpop.f32.mrf.mxu0
    %v545 = vadd.f32 0.0, %v544
    %546 = vmatmul.f32.gmra.mxu0 %v519
    %v547 = vpop.f32.mrf.mxu0
    %v548 = vadd.f32 0.0, %v547
    %549 = vmatmul.f32.gmra.mxu0 %v522
    %v550 = vpop.f32.mrf.mxu0
    %v551 = vadd.f32 0.0, %v550
    %552 = vdwg.mxu0
    %v554 = vsel %vm209, %v450, 0
    %v557 = vsel %vm209, %v453, 0
    %v560 = vsel %vm209, %v456, 0
    %v563 = vsel %vm209, %v459, 0
    %565 = vmatpush.msra.mxu0 0.0
    %566 = vmatpush.msra.mxu0 0.0
    %567 = vmatpush.msra.mxu0 0.0
    %568 = vmatpush.msra.mxu0 0.0
    %569 = vmatpush.msra.mxu0 0.0
    %570 = vmatpush.msra.mxu0 0.0
    %571 = vmatpush.msra.mxu0 0.0
    %572 = vmatpush.msra.mxu0 0.0
    %573 = vmatpush.msra.mxu0 0.0
    %574 = vmatpush.msra.mxu0 0.0
    %575 = vmatpush.msra.mxu0 0.0
    %576 = vmatpush.msra.mxu0 0.0
    %577 = vmatpush.msra.mxu0 0.0
    %578 = vmatpush.msra.mxu0 0.0
    %579 = vmatpush.msra.mxu0 %v509
    %580 = vmatpush.msra.mxu0 %v508
    %581 = vmatmul.f32.gmra.mxu0 %v554
    %v582 = vpop.f32.mrf.mxu0
    %v583 = vadd.f32 %v542, %v582
    %584 = vmatmul.f32.gmra.mxu0 %v557
    %v585 = vpop.f32.mrf.mxu0
    %v586 = vadd.f32 %v545, %v585
    %587 = vmatmul.f32.gmra.mxu0 %v560
    %v588 = vpop.f32.mrf.mxu0
    %v589 = vadd.f32 %v548, %v588
    %590 = vmatmul.f32.gmra.mxu0 %v563
    %v591 = vpop.f32.mrf.mxu0
    %v592 = vadd.f32 %v551, %v591
    %593 = vdwg.mxu0
    %v594 = vadd.f32 %v423, %v583
    %v595 = vadd.f32 %v424, %v586
    %v596 = vadd.f32 %v425, %v589
    %v597 = vadd.f32 %v426, %v592
    %v598 = vxor.u32 %v594, 2147483648
    %v599 = vxor.u32 %v595, 2147483648
    %v600 = vxor.u32 %v596, 2147483648
    %v601 = vxor.u32 %v597, 2147483648
    %v602 = vmul.f32 %v598, 1.442695
    %v603 = vpow.pop %v602
    %v604 = vmul.f32 %v599, 1.442695
    %v605 = vpow.pop %v604
    %v606 = vmul.f32 %v600, 1.442695
    %v607 = vpow.pop %v606
    %v608 = vmul.f32 %v601, 1.442695
    %v609 = vpow.pop %v608
    %v610 = vadd.f32 %v603, 1.0
    %v611 = vadd.f32 %v605, 1.0
    %v612 = vadd.f32 %v607, 1.0
    %v613 = vadd.f32 %v609, 1.0
    %v614 = vrcp.pop %v610
    %v615 = vmul.f32 %v610, %v614
    %v616 = vsub.f32 1.0, %v615
    %v617 = vmul.f32 %v614, %v616
    %v618 = vadd.f32 %v614, %v617
    %vm619 = vweird.f32 %v610
    %vm620 = vweird.f32 %v614
    %vm621 = vmor %vm619, %vm620
    %v622 = vsel %vm621, %v614, %v618
    %v623 = vand.u32 2147483647, %v610
    %vm624 = vcmp.eq.f32.partialorder %v623, 8.507059e+37
    %v625 = vand.u32 %v610, 2147483648
    %v626 = vor.u32 1.1754944e-38, %v625
    %v627 = vsel %vm624, %v626, %v622
    %v628 = vmul.f32 1.0, %v627
    %v629 = vrcp.pop %v611
    %v630 = vmul.f32 %v611, %v629
    %v631 = vsub.f32 1.0, %v630
    %v632 = vmul.f32 %v629, %v631
    %v633 = vadd.f32 %v629, %v632
    %vm634 = vweird.f32 %v611
    %vm635 = vweird.f32 %v629
    %vm636 = vmor %vm634, %vm635
    %v637 = vsel %vm636, %v629, %v633
    %v638 = vand.u32 2147483647, %v611
    %vm639 = vcmp.eq.f32.partialorder %v638, 8.507059e+37
    %v640 = vand.u32 %v611, 2147483648
    %v641 = vor.u32 1.1754944e-38, %v640
    %v642 = vsel %vm639, %v641, %v637
    %v643 = vmul.f32 1.0, %v642
    %v644 = vrcp.pop %v612
    %v645 = vmul.f32 %v612, %v644
    %v646 = vsub.f32 1.0, %v645
    %v647 = vmul.f32 %v644, %v646
    %v648 = vadd.f32 %v644, %v647
    %vm649 = vweird.f32 %v612
    %vm650 = vweird.f32 %v644
    %vm651 = vmor %vm649, %vm650
    %v652 = vsel %vm651, %v644, %v648
    %v653 = vand.u32 2147483647, %v612
    %vm654 = vcmp.eq.f32.partialorder %v653, 8.507059e+37
    %v655 = vand.u32 %v612, 2147483648
    %v656 = vor.u32 1.1754944e-38, %v655
    %v657 = vsel %vm654, %v656, %v652
    %v658 = vmul.f32 1.0, %v657
    %v659 = vrcp.pop %v613
    %v660 = vmul.f32 %v613, %v659
    %v661 = vsub.f32 1.0, %v660
    %v662 = vmul.f32 %v659, %v661
    %v663 = vadd.f32 %v659, %v662
    %vm664 = vweird.f32 %v613
    %vm665 = vweird.f32 %v659
    %vm666 = vmor %vm664, %vm665
    %v667 = vsel %vm666, %v659, %v663
    %v668 = vand.u32 2147483647, %v613
    %vm669 = vcmp.eq.f32.partialorder %v668, 8.507059e+37
    %v670 = vand.u32 %v613, 2147483648
    %v671 = vor.u32 1.1754944e-38, %v670
    %v672 = vsel %vm669, %v671, %v667
    %v673 = vmul.f32 1.0, %v672
    %674 = vst [vmem:[#allocation8] sm:$0xff] %v628
    %675 = vst [vmem:[#allocation8 + $0x8] sm:$0xff] %v643
    %676 = vst [vmem:[#allocation8 + $0x10] sm:$0xff] %v658
    %677 = vst [vmem:[#allocation8 + $0x18] sm:$0xff] %v673
    // Predicated region
    $region38: #{tpu_custom_call.1} parent=1 // pred_check
      _
    $region39: #{tpu_custom_call.1} parent=1 // pred_check_branch
      %679 = sbr.rel (0) target = $region41
    $region40: #{tpu_custom_call.1} parent=1 // pred_region
      %681 = vsyncadd [#allocation5], 0
      %s682 = sshll.u32 [#allocation8], 4
      %s683 = int_to_ptr.vmem [resolvable:$true] %s682
      %s684 = sshll.u32 %s7, 4
      %s685 = int_to_ptr.hbm [resolvable:$true] %s684
      %690 = dma.vmem_to_hbm [thread:$0]  %s683, 512, %s685, [#allocation5], 128, 128, 8
    $region41: #{tpu_custom_call.1} parent=1 // pred_fallthru
      _
    // Predicated region
    $region42: #{tpu_custom_call.1} parent=1 // pred_check
      _
    $region43: #{tpu_custom_call.1} parent=1 // pred_check_branch
      %692 = sbr.rel (0) target = $region45
    $region44: #{tpu_custom_call.1} parent=1 // pred_region
      %694 = dma.done [#allocation5], 512
    $region45: #{tpu_custom_call.1} parent=1 // pred_fallthru
      _
    %695 = vsyncpa [#allocation4], 1
    %696 = vsyncpa [#allocation7], 1
    %697 = vsyncpa [#allocation5], 1

</llo_original>
